<compile_context>
chip_gen: v5e
topology: v5e:2x2
jax: 0.10.0
libtpu: 0.0.40
codegen_flags: <defaults>
</compile_context>

<pallas_src>
import jax
import jax.numpy as jnp
from jax import lax
from jax.experimental import pallas as pl
from jax.experimental.pallas import tpu as pltpu


def _round_up(x, m):
    return ((x + m - 1) // m) * m


def fc_layer_kernel(x_ref, w1_ref, w2_ref, o_ref):
    # x_ref : (TB, D_in)   current batch tile
    # w1_ref: (H, D_in)    resident, PyTorch layout
    # w2_ref: (1, H)       resident, PyTorch layout
    # o_ref : (1, TB)      lane-dense output tile (batch on lanes)

    # Layer 1: h = relu(x @ W1^T) — contract D_in on both operands, so no
    # wrapper-side transpose of W1 is needed.
    h = lax.dot_general(
        x_ref[...], w1_ref[...],
        dimension_numbers=(((1,), (1,)), ((), ())),
        preferred_element_type=jnp.float32,
    )                                            # (TB, H), f32
    h = jnp.maximum(h, 0.0)

    # Layer 2: out^T = W2 @ h^T, expressed as dot_general contracting H on both
    # operands.  W2 stays [1, H] (no [H,1] padded tile) and the result comes out
    # directly as a lane-dense (1, TB) tile.
    o = lax.dot_general(
        w2_ref[...], h,
        dimension_numbers=(((1,), (1,)), ((), ())),
        preferred_element_type=jnp.float32,
    )                                            # (1, TB), f32
    o_ref[...] = o.astype(o_ref.dtype)


def _vmem_capacity_bytes():
    """Trace-time VMEM capacity query with a conservative (v7x) fallback."""
    try:
        info = pltpu.get_tpu_info()
        return int(getattr(info, "vmem_capacity_bytes", 64 * 1024 * 1024))
    except Exception:
        return 64 * 1024 * 1024


def _choose_tile(B, D_in, H, vmem_limit, small_vmem):
    """Pick the batch tile from (8,128)-padded VMEM bytes, not raw bytes."""
    # Per batch-row padded VMEM cost: x tile double-buffered (2x) + h
    # intermediate, all f32 and lane-padded to 128.
    padded_row_bytes = (2 * _round_up(D_in, 128) + _round_up(H, 128)) * 4
    budget = vmem_limit // 2  # headroom for weights / output tile / regalloc
    tb_cap = max(128, (budget // padded_row_bytes) // 128 * 128)
    tb_default = 8192 if small_vmem else 16384
    tb = min(tb_default, tb_cap)

    if B <= tb:
        tb = B
        # v7x (2 TCs/chip): avoid a grid of 1 for mid/large batches so both
        # TensorCores get work; split into (at least) two lane-aligned tiles.
        if small_vmem and B > 2048:
            tb = _round_up(pl.cdiv(B, 2), 128)
    return tb


def fc_layer_forward(x, w1, w2, *, block_b=None):
    """x: [B, D_in]; w1: [H, D_in]; w2: [1, H]  (PyTorch nn.Linear weight layout)."""
    B, D_in = x.shape
    H, D_in_w = w1.shape
    assert D_in_w == D_in
    assert w2.shape == (1, H)

    vmem_cap = _vmem_capacity_bytes()
    small_vmem = vmem_cap <= 64 * 1024 * 1024          # v7x-class per-TC VMEM
    vmem_limit = (32 if small_vmem else 64) * 1024 * 1024

    if block_b is None:
        tb = _choose_tile(B, D_in, H, vmem_limit, small_vmem)
    else:
        tb = B if B <= block_b else block_b

    grid = (pl.cdiv(B, tb),)

    itemsize = jnp.dtype(x.dtype).itemsize
    cost = pl.CostEstimate(
        flops=2 * B * D_in * H + 2 * B * H,
        transcendentals=0,
        bytes_accessed=(x.size + w1.size + w2.size + B) * itemsize,
    )

    out_t = pl.pallas_call(
        fc_layer_kernel,
        out_shape=jax.ShapeDtypeStruct((1, B), x.dtype),
        grid_spec=pltpu.PrefetchScalarGridSpec(
            num_scalar_prefetch=0,
            grid=grid,
            in_specs=[
                pl.BlockSpec((tb, D_in), lambda i: (i, 0)),   # batch-tiled x
                pl.BlockSpec((H, D_in), lambda i: (0, 0)),    # resident W1
                pl.BlockSpec((1, H), lambda i: (0, 0)),       # resident W2
            ],
            out_specs=pl.BlockSpec((1, tb), lambda i: (0, i)),  # lane-dense out
        ),
        compiler_params=pltpu.CompilerParams(
            dimension_semantics=("parallel",),  # shards batch tiles across TCs
            vmem_limit_bytes=vmem_limit,
        ),
        cost_estimate=cost,
    )(x, w1, w2)

    # (1, B) -> (B, 1): identical element order, plain reshape in the wrapper.
    return out_t.reshape(B, 1)


def _reference(x, w1, w2):
    return jnp.maximum(x @ w1.T, 0.0) @ w2.T


if __name__ == "__main__":
    # Shapes consistent with the module: fc1_in_dim=32, fc1_out_dim=64.
    # (fc2_out_dim in the PyTorch __init__ is unused — second Linear has out_dim 1.)
    B, fc1_in_dim, fc1_out_dim = 8, 32, 64

    key = jax.random.PRNGKey(0)
    kx, kw1, kw2, kx2 = jax.random.split(key, 4)

    x = jax.random.normal(kx, (B, fc1_in_dim), dtype=jnp.float32)
    w1 = jax.random.normal(kw1, (fc1_out_dim, fc1_in_dim), dtype=jnp.float32) * 0.1
    w2 = jax.random.normal(kw2, (1, fc1_out_dim), dtype=jnp.float32) * 0.1

    # Small batch: single full-batch block (launch-cost regime, per review).
    out = jax.block_until_ready(fc_layer_forward(x, w1, w2))
    ref = _reference(x, w1, w2)
    assert out.shape == (B, 1)
    assert jnp.allclose(out, ref, atol=1e-5, rtol=1e-5)

    # Multi-block pipelined path (exact division): grid of 4 batch tiles.
    B2 = 1024
    x2 = jax.random.normal(kx2, (B2, fc1_in_dim), dtype=jnp.float32)
    out2 = jax.block_until_ready(fc_layer_forward(x2, w1, w2, block_b=256))
    ref2 = _reference(x2, w1, w2)
    assert out2.shape == (B2, 1)
    assert jnp.allclose(out2, ref2, atol=1e-5, rtol=1e-5)

    # Partial-tail path (B % tb != 0): grid of 3 tiles, last tile masked.
    B3 = 600
    x3 = x2[:B3]
    out3 = jax.block_until_ready(fc_layer_forward(x3, w1, w2, block_b=256))
    ref3 = _reference(x3, w1, w2)
    assert out3.shape == (B3, 1)
    assert jnp.allclose(out3, ref3, atol=1e-5, rtol=1e-5)

    print("KERNEL_OK")
</pallas_src>

<mosaic_0001>
module attributes {stable_mosaic.version = 11 : i64} {
  func.func @fc_layer_kernel(%arg0: i32, %arg1: memref<8x32xf32, #tpu.memory_space<vmem>>, %arg2: memref<64x32xf32, #tpu.memory_space<vmem>>, %arg3: memref<1x64xf32, #tpu.memory_space<vmem>>, %arg4: memref<1x8xf32, #tpu.memory_space<vmem>>) attributes {dimension_semantics = [#tpu.dimension_semantics<parallel>], iteration_bounds = array<i64: 1>, scalar_prefetch = 0 : i64, scratch_operands = 0 : i64, tpu.core_type = #tpu.core_type<tc>, window_params = [{transform_indices = @transform_0, window_bounds = array<i64: 8, 32>}, {pipeline_mode = #tpu.pipeline_mode<synchronous>, transform_indices = @transform_1, window_bounds = array<i64: 64, 32>}, {pipeline_mode = #tpu.pipeline_mode<synchronous>, transform_indices = @transform_2, window_bounds = array<i64: 1, 64>}, {transform_indices = @transform_3, window_bounds = array<i64: 1, 8>}]} {
    %c0 = arith.constant 0 : index
    %c0_0 = arith.constant 0 : index
    %0 = vector.load %arg1[%c0, %c0_0] : memref<8x32xf32, #tpu.memory_space<vmem>>, vector<8x32xf32>
    %c0_1 = arith.constant 0 : index
    %c0_2 = arith.constant 0 : index
    %1 = vector.load %arg2[%c0_1, %c0_2] : memref<64x32xf32, #tpu.memory_space<vmem>>, vector<64x32xf32>
    %cst = arith.constant dense<0.000000e+00> : vector<8x64xf32>
    %2 = tpu.matmul %0, %1, %cst {dimension_numbers = #tpu.dot_dimension_numbers<[1], [1], [0], [0], [0, 0, 1, 0], [], []>} : vector<8x32xf32>, vector<64x32xf32>, vector<8x64xf32> -> vector<8x64xf32>
    %cst_3 = arith.constant 0.000000e+00 : f32
    %3 = vector.broadcast %cst_3 : f32 to vector<8x64xf32>
    %4 = arith.maximumf %2, %3 : vector<8x64xf32>
    %c0_4 = arith.constant 0 : index
    %c0_5 = arith.constant 0 : index
    %5 = vector.load %arg3[%c0_4, %c0_5] : memref<1x64xf32, #tpu.memory_space<vmem>>, vector<1x64xf32>
    %cst_6 = arith.constant dense<0.000000e+00> : vector<1x8xf32>
    %6 = tpu.matmul %5, %4, %cst_6 {dimension_numbers = #tpu.dot_dimension_numbers<[1], [1], [0], [0], [0, 0, 1, 0], [], []>} : vector<1x64xf32>, vector<8x64xf32>, vector<1x8xf32> -> vector<1x8xf32>
    %c0_7 = arith.constant 0 : index
    %c0_8 = arith.constant 0 : index
    %7 = vector.load %arg4[%c0_7, %c0_8] : memref<1x8xf32, #tpu.memory_space<vmem>>, vector<1x8xf32>
    tpu.vector_store %arg4[%c0_7, %c0_8], %6 {strides = array<i32>} : memref<1x8xf32, #tpu.memory_space<vmem>>, vector<1x8xf32>,
    return
  }
  func.func @transform_0(%arg0: i32) -> (i32, i32) {
    %c0_i32 = arith.constant 0 : i32
    %c0_i32_0 = arith.constant 0 : i32
    return %arg0, %c0_i32 : i32, i32
  }
  func.func @transform_1(%arg0: i32) -> (i32, i32) {
    %c0_i32 = arith.constant 0 : i32
    %c0_i32_0 = arith.constant 0 : i32
    %c0_i32_1 = arith.constant 0 : i32
    return %c0_i32, %c0_i32_0 : i32, i32
  }
  func.func @transform_2(%arg0: i32) -> (i32, i32) {
    %c0_i32 = arith.constant 0 : i32
    %c0_i32_0 = arith.constant 0 : i32
    %c0_i32_1 = arith.constant 0 : i32
    return %c0_i32, %c0_i32_0 : i32, i32
  }
  func.func @transform_3(%arg0: i32) -> (i32, i32) {
    %c0_i32 = arith.constant 0 : i32
    %c0_i32_0 = arith.constant 0 : i32
    return %c0_i32, %arg0 : i32, i32
  }
}

</mosaic_0001>

<llo_original>
// kernel: tpu_custom_call.1
$region0: #{tpu_custom_call.1}
  #allocation0 [shape = 'u32[]', space=smem, size = 0x4, offset = 0x4, fixed_abs, tag = 'smem constant byte address 0x4 - core index']
  #allocation1 [shape = 'u32[72,128]{1,0:T(1,128)}', space=vmem, size = 0x9000, scoped, tag = 'internal scratch']
  %s0 = inlined_call_operand.vmem [shape: f32[8,32], index: 0, kind: input, shape index: {}]
  %s1 = inlined_call_operand.vmem [shape: f32[64,32], index: 1, kind: input, shape index: {}]
  %s2 = inlined_call_operand.vmem [shape: f32[1,64], index: 2, kind: input, shape index: {}]
  %s3 = inlined_call_operand.hbm [shape: f32[1,8], index: 3, kind: output, shape index: {}]
  %s4 = sld [smem:[#allocation0]]
  $region22: #{tpu_custom_call.1} parent=0
    _
  %s6 = ssub.s32 1, %s4
  %s7 = scalar_select 0, %s6, %s4
  $region1: #{tpu_custom_call.1} parent=0
    #allocation2 [shape = 'u8[512]{0}', space=vmem, size = 0x400, scoped, tag = 'output window, operand 0, single buffered']
    #allocation3 [shape = 's32[1]{0}', space=sflag, size = 0x4, scoped, tag = 'scoped memory for tpu_custom_call.1']
    %8 = vsyncpa [#allocation3], 0
    // Predicated region
    $region2: #{tpu_custom_call.1} parent=1 // pred_check
      _
    $region3: #{tpu_custom_call.1} parent=1 // pred_check_branch
      %10 = sbr.rel (0) target = $region5
    $region4: #{tpu_custom_call.1} parent=1 // pred_region
      _
    $region5: #{tpu_custom_call.1} parent=1 // pred_fallthru
      _
    // Predicated region
    $region6: #{tpu_custom_call.1} parent=1 // pred_check
      _
    $region7: #{tpu_custom_call.1} parent=1 // pred_check_branch
      %12 = sbr.rel (0) target = $region9
    $region8: #{tpu_custom_call.1} parent=1 // pred_region
      _
    $region9: #{tpu_custom_call.1} parent=1 // pred_fallthru
      _
    // Predicated region
    $region10: #{tpu_custom_call.1} parent=1 // pred_check
      _
    $region11: #{tpu_custom_call.1} parent=1 // pred_check_branch
      %14 = sbr.rel (0) target = $region13
    $region12: #{tpu_custom_call.1} parent=1 // pred_region
      _
    $region13: #{tpu_custom_call.1} parent=1 // pred_fallthru
      _
    %v15 = vld [vmem:[%s0] sm:$0xff]
    %v16 = vld [vmem:[%s1] sm:$0xff]
    %v17 = vld [vmem:[%s1 + $0x8] sm:$0xff]
    %v18 = vld [vmem:[%s1 + $0x10] sm:$0xff]
    %v19 = vld [vmem:[%s1 + $0x18] sm:$0xff]
    %v20 = vld [vmem:[%s1 + $0x20] sm:$0xff]
    %v21 = vld [vmem:[%s1 + $0x28] sm:$0xff]
    %v22 = vld [vmem:[%s1 + $0x30] sm:$0xff]
    %v23 = vld [vmem:[%s1 + $0x38] sm:$0xff]
    %vm24 = vcmask 261120
    %v26 = vsel %vm24, %v15, 0
    %v29 = vsel %vm24, %v16, 0
    %v32 = vsel %vm24, %v17, 0
    %v35 = vsel %vm24, %v18, 0
    %v38 = vsel %vm24, %v19, 0
    %v41 = vsel %vm24, %v20, 0
    %v44 = vsel %vm24, %v21, 0
    %v47 = vsel %vm24, %v22, 0
    %v50 = vsel %vm24, %v23, 0
    %52 = vmatpush.xpose.msra.mxu0 0.0
    %53 = vmatpush.xpose.msra.mxu0 0.0
    %54 = vmatpush.xpose.msra.mxu0 0.0
    %55 = vmatpush.xpose.msra.mxu0 0.0
    %56 = vmatpush.xpose.msra.mxu0 0.0
    %57 = vmatpush.xpose.msra.mxu0 0.0
    %58 = vmatpush.xpose.msra.mxu0 0.0
    %59 = vmatpush.xpose.msra.mxu0 0.0
    %60 = vmatpush.xpose.msra.mxu0 %v50
    %61 = vmatpush.xpose.msra.mxu0 %v47
    %62 = vmatpush.xpose.msra.mxu0 %v44
    %63 = vmatpush.xpose.msra.mxu0 %v41
    %64 = vmatpush.xpose.msra.mxu0 %v38
    %65 = vmatpush.xpose.msra.mxu0 %v35
    %66 = vmatpush.xpose.msra.mxu0 %v32
    %67 = vmatpush.xpose.msra.mxu0 %v29
    %68 = vmatmul.f32.gmra.mxu0 %v26
    %v69 = vpop.f32.mrf.mxu0
    %v70 = vadd.f32 0.0, %v69
    %71 = vdwg.mxu0
    %v72 = vmax.f32 %v70, 0.0
    %v73 = vld [vmem:[%s2] sm:$0x1]
    %vm74 = vcmask 523264
    %v76 = vsel %vm74, %v73, 0
    %v79 = vsel %vm74, %v72, 0
    %81 = vmatpush.xpose.msra.mxu0 0.0
    %82 = vmatpush.xpose.msra.mxu0 0.0
    %83 = vmatpush.xpose.msra.mxu0 0.0
    %84 = vmatpush.xpose.msra.mxu0 0.0
    %85 = vmatpush.xpose.msra.mxu0 0.0
    %86 = vmatpush.xpose.msra.mxu0 0.0
    %87 = vmatpush.xpose.msra.mxu0 0.0
    %88 = vmatpush.xpose.msra.mxu0 0.0
    %89 = vmatpush.xpose.msra.mxu0 0.0
    %90 = vmatpush.xpose.msra.mxu0 0.0
    %91 = vmatpush.xpose.msra.mxu0 0.0
    %92 = vmatpush.xpose.msra.mxu0 0.0
    %93 = vmatpush.xpose.msra.mxu0 0.0
    %94 = vmatpush.xpose.msra.mxu0 0.0
    %95 = vmatpush.xpose.msra.mxu0 0.0
    %96 = vmatpush.xpose.msra.mxu0 %v79
    %97 = vmatmul.f32.gmra.mxu0 %v76
    %v98 = vpop.f32.mrf.mxu0
    %v99 = vadd.f32 0.0, %v98
    %100 = vdwg.mxu0
    %vm101 = vcmask 57344
    %102 = vst.msk [vmem:[#allocation2] sm:$0x1] %vm101, %v99
    // Predicated region
    $region14: #{tpu_custom_call.1} parent=1 // pred_check
      _
    $region15: #{tpu_custom_call.1} parent=1 // pred_check_branch
      %104 = sbr.rel (0) target = $region17
    $region16: #{tpu_custom_call.1} parent=1 // pred_region
      %106 = vsyncadd [#allocation3], 0
      %s108 = sshll.u32 [#allocation2], 4
      %s109 = int_to_ptr.vmem [resolvable:$true] %s108
      %s110 = sshll.u32 %s3, 4
      %s111 = int_to_ptr.hbm [resolvable:$true] %s110
      %113 = dma.vmem_to_hbm [thread:$0]  %s109, 16, %s111, [#allocation3]
    $region17: #{tpu_custom_call.1} parent=1 // pred_fallthru
      _
    // Predicated region
    $region18: #{tpu_custom_call.1} parent=1 // pred_check
      _
    $region19: #{tpu_custom_call.1} parent=1 // pred_check_branch
      %115 = sbr.rel (0) target = $region21
    $region20: #{tpu_custom_call.1} parent=1 // pred_region
      %117 = dma.done [#allocation3], 16
    $region21: #{tpu_custom_call.1} parent=1 // pred_fallthru
      _
    %118 = vsyncpa [#allocation3], 1

</llo_original>
